<compile_context>
chip_gen: v7x
topology: tpu7x:2x2x1
jax: 0.10.0
libtpu: 0.0.40
codegen_flags: <defaults>
</compile_context>

<pallas_src>
import jax
import jax.numpy as jnp
from jax.experimental import pallas as pl
from jax.experimental.pallas import tpu as pltpu

_LANES = 128          # vreg lane width
_MAX_QTILE = 1024     # up to 8 lane-groups of queries per grid step


def _gibbs_batch_kernel(idx_ref, Wc_ref, Wt_ref, W3_ref, out_ref):
    """One grid step = Q independent queries, packed along lanes.

    idx_ref : (1, 2 + n_inter, Q) int32   rows = [idx_c; idx_t; idx_inter...]
    Wc_ref  : (2k+1, V) f32   [m1_2 @ L^T ; m1_3 @ L^T ; sum(m1_1,0) @ L^T]
    Wt_ref  : (2k,   V) f32   [m2_2 @ L^T ; m2_3 @ L^T]
    W3_ref  : (k,    V) f32    m3_3 @ L^T
    out_ref : (1, 1, Q) f32   sigmoid(energy) per query (lane-dense)
    """
    idx = idx_ref[0]                          # (2 + n_inter, Q) int32
    n_inter = idx.shape[0] - 2
    Q = idx.shape[1]
    V = Wc_ref.shape[1]
    k = W3_ref.shape[0]
    f32 = jnp.float32

    # Vocab-row index along sublanes, queries along lanes.
    row_iota = jax.lax.broadcasted_iota(jnp.int32, (V, Q), 0)

    # One-hot gathers for the centre / target indices (0/1 weights => exact;
    # an out-of-range index yields zero features instead of an OOB VMEM read).
    oh_c = (row_iota == idx[0:1, :]).astype(f32)                  # (V, Q)
    oh_t = (row_iota == idx[1:2, :]).astype(f32)                  # (V, Q)

    # Three independent MXU matmuls against the pre-folded tables.
    u = jnp.dot(Wc_ref[...], oh_c, preferred_element_type=f32)    # (2k+1, Q)
    v = jnp.dot(Wt_ref[...], oh_t, preferred_element_type=f32)    # (2k,   Q)

    e1 = u[2 * k:2 * k + 1, :]                                     # Node  (1, Q)
    e2 = jnp.sum(u[:k, :] * v[:k, :], axis=0, keepdims=True)       # Pair  (1, Q)

    if n_inter > 0:
        # Multi-hot counts of the intermediate indices, accumulated as int32
        # compares with a single f32 cast at the end.
        cnt = (row_iota == idx[2:3, :]).astype(jnp.int32)
        for j in range(3, 2 + n_inter):
            cnt = cnt + (row_iota == idx[j:j + 1, :]).astype(jnp.int32)
        r = jnp.dot(W3_ref[...], cnt.astype(f32),
                    preferred_element_type=f32)                    # (k, Q)
        e3 = jnp.sum(u[k:2 * k, :] * v[k:2 * k, :] * r,
                     axis=0, keepdims=True)                        # Triplet
    else:
        e3 = jnp.zeros_like(e1)

    energy = e1 + e2 + e3                                          # (1, Q)
    out_ref[...] = jax.nn.sigmoid(energy)[None]                    # (1, 1, Q)


def stack_tables(L, params):
    """One-time parameter prep: fold L^T into every feature matrix.

    Redo only when L / m* change (amortized across all queries).
    """
    m11, m12, m22, m13, m23, m33 = params
    LT = jnp.asarray(L, jnp.float32).T                               # (d, V)
    W12 = jnp.asarray(m12, jnp.float32) @ LT                         # (k, V)
    W13 = jnp.asarray(m13, jnp.float32) @ LT                         # (k, V)
    node = (jnp.sum(jnp.asarray(m11, jnp.float32), axis=0) @ LT)[None, :]  # (1, V)
    Wc = jnp.concatenate([W12, W13, node], axis=0)                   # (2k+1, V)
    W22 = jnp.asarray(m22, jnp.float32) @ LT
    W23 = jnp.asarray(m23, jnp.float32) @ LT
    Wt = jnp.concatenate([W22, W23], axis=0)                         # (2k, V)
    W3 = jnp.asarray(m33, jnp.float32) @ LT                          # (k, V)
    return Wc, Wt, W3


def pack_indices(idx_c, idx_t, idx_intermediate):
    """Pack per-query indices into one (B, 2 + n_inter) int32 array (done once)."""
    idx_c = jnp.asarray(idx_c, jnp.int32).reshape(-1, 1)
    idx_t = jnp.asarray(idx_t, jnp.int32).reshape(-1, 1)
    idx_i = jnp.asarray(idx_intermediate, jnp.int32).reshape(idx_c.shape[0], -1)
    return jnp.concatenate([idx_c, idx_t, idx_i], axis=1)


def _gibbs_forward_batched(idx_packed, tables):
    Wc, Wt, W3 = tables
    B, ni = idx_packed.shape
    # Query tile: multiple of 128, at most 1024, no larger than needed for B.
    q_tile = min(_MAX_QTILE, _LANES * pl.cdiv(B, _LANES))
    n_tiles = pl.cdiv(B, q_tile)
    b_pad = n_tiles * q_tile
    if b_pad != B:                     # pad with index 0 (valid), sliced off below
        idx_packed = jnp.pad(idx_packed, ((0, b_pad - B), (0, 0)))
    # (n_tiles, 2 + n_inter, q_tile): queries lane-major inside each tile.
    idx_tiles = idx_packed.reshape(n_tiles, q_tile, ni).transpose(0, 2, 1)

    out = pl.pallas_call(
        _gibbs_batch_kernel,
        out_shape=jax.ShapeDtypeStruct((n_tiles, 1, q_tile), jnp.float32),
        grid=(n_tiles,),
        in_specs=[
            pl.BlockSpec((1, ni, q_tile), lambda i: (i, 0, 0)),
            pl.BlockSpec(Wc.shape, lambda i: (0, 0)),    # resident across grid
            pl.BlockSpec(Wt.shape, lambda i: (0, 0)),
            pl.BlockSpec(W3.shape, lambda i: (0, 0)),
        ],
        out_specs=pl.BlockSpec((1, 1, q_tile), lambda i: (i, 0, 0)),
        compiler_params=pltpu.CompilerParams(
            dimension_semantics=("parallel",)),
    )(idx_tiles, Wc, Wt, W3)
    return out.reshape(b_pad)[:B]


gibbs_forward_batched = jax.jit(_gibbs_forward_batched)


def gibbs_forward(idx_c, idx_t, idx_intermediate, L, params):
    """Original single-query Gibbs_dist.forward semantics -> scalar in (0, 1).

    For throughput, prefer stack_tables() + pack_indices() once, then
    gibbs_forward_batched() on many queries.
    """
    tables = stack_tables(L, params)
    idx = pack_indices(jnp.asarray([idx_c]), jnp.asarray([idx_t]),
                       jnp.asarray(idx_intermediate).reshape(1, -1))
    return gibbs_forward_batched(idx, tables)[0]


if __name__ == "__main__":
    d, k, V, n_inter, B = 32, 16, 64, 3, 256

    key = jax.random.PRNGKey(0)
    kL, k11, k12, k22, k13, k23, k33, kc, kt, ki = jax.random.split(key, 10)

    # Embedding table scaled so energies stay in a numerically interesting range.
    L = jax.random.normal(kL, (V, d), jnp.float32) * 0.1
    m11 = jax.random.normal(k11, (k, d), jnp.float32)
    m12 = jax.random.normal(k12, (k, d), jnp.float32)
    m22 = jax.random.normal(k22, (k, d), jnp.float32)
    m13 = jax.random.normal(k13, (k, d), jnp.float32)
    m23 = jax.random.normal(k23, (k, d), jnp.float32)
    m33 = jax.random.normal(k33, (k, d), jnp.float32)
    params = (m11, m12, m22, m13, m23, m33)

    idx_c = jax.random.randint(kc, (B,), 0, V, dtype=jnp.int32)
    idx_t = jax.random.randint(kt, (B,), 0, V, dtype=jnp.int32)
    idx_inter = jax.random.randint(ki, (B, n_inter), 0, V, dtype=jnp.int32)

    # Batched path (the performant one).
    tables = stack_tables(L, params)
    idx_packed = pack_indices(idx_c, idx_t, idx_inter)
    out = jax.block_until_ready(gibbs_forward_batched(idx_packed, tables))

    # Pure-JAX reference mirroring the PyTorch forward per query.
    def ref_one(ic, it, ii):
        x_c = L[ic]
        x_t = L[it]
        e1 = jnp.sum(m11 @ x_c)                         # Node_feature
        e2 = (m12 @ x_c) @ (m22 @ x_t)                  # Pair_feature
        e3 = jnp.zeros((), jnp.float32)
        for j in range(n_inter):                        # Triplet_feature per idx
            x_i = L[ii[j]]
            e3 = e3 + jnp.sum((m13 @ x_c) * (m23 @ x_t) * (m33 @ x_i))
        return jax.nn.sigmoid(e1 + e2 + e3)

    ref = jax.vmap(ref_one)(idx_c, idx_t, idx_inter)
    assert jnp.allclose(out, ref, atol=5e-4, rtol=5e-4), (
        "max abs err", float(jnp.max(jnp.abs(out - ref))))

    # Single-query path with the original module signature.
    one = jax.block_until_ready(
        gibbs_forward(3, 7, jnp.array([1, 5, 9], jnp.int32), L, params))
    one_ref = ref_one(jnp.int32(3), jnp.int32(7), jnp.array([1, 5, 9], jnp.int32))
    assert jnp.allclose(one, one_ref, atol=5e-4, rtol=5e-4), (one, one_ref)

    print("KERNEL_OK")
</pallas_src>

<mosaic_0001>
module attributes {stable_mosaic.version = 11 : i64} {
  func.func @_gibbs_batch_kernel(%arg0: i32, %arg1: memref<1x5x256xi32, #tpu.memory_space<vmem>>, %arg2: memref<33x64xf32, #tpu.memory_space<vmem>>, %arg3: memref<32x64xf32, #tpu.memory_space<vmem>>, %arg4: memref<16x64xf32, #tpu.memory_space<vmem>>, %arg5: memref<1x1x256xf32, #tpu.memory_space<vmem>>) attributes {dimension_semantics = [#tpu.dimension_semantics<parallel>], iteration_bounds = array<i64: 1>, scalar_prefetch = 0 : i64, scratch_operands = 0 : i64, tpu.core_type = #tpu.core_type<tc>, window_params = [{transform_indices = @transform_0, window_bounds = array<i64: 1, 5, 256>}, {pipeline_mode = #tpu.pipeline_mode<synchronous>, transform_indices = @transform_1, window_bounds = array<i64: 33, 64>}, {pipeline_mode = #tpu.pipeline_mode<synchronous>, transform_indices = @transform_2, window_bounds = array<i64: 32, 64>}, {pipeline_mode = #tpu.pipeline_mode<synchronous>, transform_indices = @transform_3, window_bounds = array<i64: 16, 64>}, {transform_indices = @transform_4, window_bounds = array<i64: 1, 1, 256>}]} {
    %c0 = arith.constant 0 : index
    %c0_0 = arith.constant 0 : index
    %c0_1 = arith.constant 0 : index
    %0 = vector.load %arg1[%c0, %c0_0, %c0_1] : memref<1x5x256xi32, #tpu.memory_space<vmem>>, vector<1x5x256xi32>
    %1 = vector.shape_cast %0 : vector<1x5x256xi32> to vector<5x256xi32>
    %2 = tpu.iota {dimensions = array<i32: 0>} : vector<64x256xi32>
    %3 = vector.extract_strided_slice %1 {offsets = [0, 0], sizes = [1, 256], strides = [1, 1]} : vector<5x256xi32> to vector<1x256xi32>
    %4 = vector.broadcast %3 : vector<1x256xi32> to vector<64x256xi32>
    %5 = arith.cmpi eq, %2, %4 : vector<64x256xi32>
    %6 = arith.extui %5 : vector<64x256xi1> to vector<64x256xi32>
    %7 = arith.sitofp %6 : vector<64x256xi32> to vector<64x256xf32>
    %8 = vector.extract_strided_slice %1 {offsets = [1, 0], sizes = [1, 256], strides = [1, 1]} : vector<5x256xi32> to vector<1x256xi32>
    %9 = vector.broadcast %8 : vector<1x256xi32> to vector<64x256xi32>
    %10 = arith.cmpi eq, %2, %9 : vector<64x256xi32>
    %11 = arith.extui %10 : vector<64x256xi1> to vector<64x256xi32>
    %12 = arith.sitofp %11 : vector<64x256xi32> to vector<64x256xf32>
    %c0_2 = arith.constant 0 : index
    %c0_3 = arith.constant 0 : index
    %13 = vector.load %arg2[%c0_2, %c0_3] : memref<33x64xf32, #tpu.memory_space<vmem>>, vector<33x64xf32>
    %cst = arith.constant dense<0.000000e+00> : vector<33x256xf32>
    %14 = tpu.matmul %13, %7, %cst {dimension_numbers = #tpu.dot_dimension_numbers<[1], [0], [0], [1], [0, 0, 1, 1], [], []>} : vector<33x64xf32>, vector<64x256xf32>, vector<33x256xf32> -> vector<33x256xf32>
    %c0_4 = arith.constant 0 : index
    %c0_5 = arith.constant 0 : index
    %15 = vector.load %arg3[%c0_4, %c0_5] : memref<32x64xf32, #tpu.memory_space<vmem>>, vector<32x64xf32>
    %cst_6 = arith.constant dense<0.000000e+00> : vector<32x256xf32>
    %16 = tpu.matmul %15, %12, %cst_6 {dimension_numbers = #tpu.dot_dimension_numbers<[1], [0], [0], [1], [0, 0, 1, 1], [], []>} : vector<32x64xf32>, vector<64x256xf32>, vector<32x256xf32> -> vector<32x256xf32>
    %17 = vector.extract_strided_slice %14 {offsets = [32, 0], sizes = [1, 256], strides = [1, 1]} : vector<33x256xf32> to vector<1x256xf32>
    %18 = vector.extract_strided_slice %14 {offsets = [0, 0], sizes = [16, 256], strides = [1, 1]} : vector<33x256xf32> to vector<16x256xf32>
    %19 = vector.extract_strided_slice %16 {offsets = [0, 0], sizes = [16, 256], strides = [1, 1]} : vector<32x256xf32> to vector<16x256xf32>
    %20 = arith.mulf %18, %19 : vector<16x256xf32>
    %cst_7 = arith.constant dense<0.000000e+00> : vector<256xf32>
    %21 = vector.multi_reduction <add>, %20, %cst_7 [0] : vector<16x256xf32> to vector<256xf32>
    %22 = vector.shape_cast %21 : vector<256xf32> to vector<1x256xf32>
    %23 = vector.extract_strided_slice %1 {offsets = [2, 0], sizes = [1, 256], strides = [1, 1]} : vector<5x256xi32> to vector<1x256xi32>
    %24 = vector.broadcast %23 : vector<1x256xi32> to vector<64x256xi32>
    %25 = arith.cmpi eq, %2, %24 : vector<64x256xi32>
    %26 = arith.extui %25 : vector<64x256xi1> to vector<64x256xi32>
    %27 = vector.extract_strided_slice %1 {offsets = [3, 0], sizes = [1, 256], strides = [1, 1]} : vector<5x256xi32> to vector<1x256xi32>
    %28 = vector.broadcast %27 : vector<1x256xi32> to vector<64x256xi32>
    %29 = arith.cmpi eq, %2, %28 : vector<64x256xi32>
    %30 = arith.extui %29 : vector<64x256xi1> to vector<64x256xi32>
    %31 = arith.addi %26, %30 : vector<64x256xi32>
    %32 = vector.extract_strided_slice %1 {offsets = [4, 0], sizes = [1, 256], strides = [1, 1]} : vector<5x256xi32> to vector<1x256xi32>
    %33 = vector.broadcast %32 : vector<1x256xi32> to vector<64x256xi32>
    %34 = arith.cmpi eq, %2, %33 : vector<64x256xi32>
    %35 = arith.extui %34 : vector<64x256xi1> to vector<64x256xi32>
    %36 = arith.addi %31, %35 : vector<64x256xi32>
    %c0_8 = arith.constant 0 : index
    %c0_9 = arith.constant 0 : index
    %37 = vector.load %arg4[%c0_8, %c0_9] : memref<16x64xf32, #tpu.memory_space<vmem>>, vector<16x64xf32>
    %38 = arith.sitofp %36 : vector<64x256xi32> to vector<64x256xf32>
    %cst_10 = arith.constant dense<0.000000e+00> : vector<16x256xf32>
    %39 = tpu.matmul %37, %38, %cst_10 {dimension_numbers = #tpu.dot_dimension_numbers<[1], [0], [0], [1], [0, 0, 1, 1], [], []>} : vector<16x64xf32>, vector<64x256xf32>, vector<16x256xf32> -> vector<16x256xf32>
    %40 = vector.extract_strided_slice %14 {offsets = [16, 0], sizes = [16, 256], strides = [1, 1]} : vector<33x256xf32> to vector<16x256xf32>
    %41 = vector.extract_strided_slice %16 {offsets = [16, 0], sizes = [16, 256], strides = [1, 1]} : vector<32x256xf32> to vector<16x256xf32>
    %42 = arith.mulf %40, %41 : vector<16x256xf32>
    %43 = arith.mulf %42, %39 : vector<16x256xf32>
    %cst_11 = arith.constant dense<0.000000e+00> : vector<256xf32>
    %44 = vector.multi_reduction <add>, %43, %cst_11 [0] : vector<16x256xf32> to vector<256xf32>
    %45 = vector.shape_cast %44 : vector<256xf32> to vector<1x256xf32>
    %46 = arith.addf %17, %22 : vector<1x256xf32>
    %47 = arith.addf %46, %45 : vector<1x256xf32>
    %48 = arith.negf %47 : vector<1x256xf32>
    %49 = math.exp %48 : vector<1x256xf32>
    %cst_12 = arith.constant 1.000000e+00 : f32
    %50 = vector.broadcast %cst_12 : f32 to vector<1x256xf32>
    %51 = arith.addf %50, %49 : vector<1x256xf32>
    %52 = arith.divf %50, %51 : vector<1x256xf32>
    %53 = vector.shape_cast %52 : vector<1x256xf32> to vector<1x1x256xf32>
    %c0_13 = arith.constant 0 : index
    %c0_14 = arith.constant 0 : index
    %c0_15 = arith.constant 0 : index
    %54 = vector.load %arg5[%c0_13, %c0_14, %c0_15] : memref<1x1x256xf32, #tpu.memory_space<vmem>>, vector<1x1x256xf32>
    tpu.vector_store %arg5[%c0_13, %c0_14, %c0_15], %53 {strides = array<i32>} : memref<1x1x256xf32, #tpu.memory_space<vmem>>, vector<1x1x256xf32>,
    return
  }
  func.func @transform_0(%arg0: i32) -> (i32, i32, i32) {
    %c0_i32 = arith.constant 0 : i32
    %c0_i32_0 = arith.constant 0 : i32
    %c0_i32_1 = arith.constant 0 : i32
    return %arg0, %c0_i32, %c0_i32_0 : i32, i32, i32
  }
  func.func @transform_1(%arg0: i32) -> (i32, i32) {
    %c0_i32 = arith.constant 0 : i32
    %c0_i32_0 = arith.constant 0 : i32
    %c0_i32_1 = arith.constant 0 : i32
    return %c0_i32, %c0_i32_0 : i32, i32
  }
  func.func @transform_2(%arg0: i32) -> (i32, i32) {
    %c0_i32 = arith.constant 0 : i32
    %c0_i32_0 = arith.constant 0 : i32
    %c0_i32_1 = arith.constant 0 : i32
    return %c0_i32, %c0_i32_0 : i32, i32
  }
  func.func @transform_3(%arg0: i32) -> (i32, i32) {
    %c0_i32 = arith.constant 0 : i32
    %c0_i32_0 = arith.constant 0 : i32
    %c0_i32_1 = arith.constant 0 : i32
    return %c0_i32, %c0_i32_0 : i32, i32
  }
  func.func @transform_4(%arg0: i32) -> (i32, i32, i32) {
    %c0_i32 = arith.constant 0 : i32
    %c0_i32_0 = arith.constant 0 : i32
    %c0_i32_1 = arith.constant 0 : i32
    return %arg0, %c0_i32, %c0_i32_0 : i32, i32, i32
  }
}

</mosaic_0001>

<llo_original>
// kernel: _gibbs_forward_batched.1
$region0: #{_gibbs_forward_batched.1}
  #allocation0 [shape = 'u32[]', space=smem, size = 0x4, offset = 0x4, fixed_abs, tag = 'smem constant byte address 0x4 - core index']
  #allocation1 [shape = 'u32[144,128]{1,0:T(1,128)}', space=vmem, size = 0x12000, scoped, tag = 'internal scratch']
  %s0 = inlined_call_operand.hbm [shape: s32[1,5,256], index: 0, kind: input, shape index: {}]
  %s1 = inlined_call_operand.hbm [shape: f32[33,64], index: 1, kind: input, shape index: {}]
  %s2 = inlined_call_operand.hbm [shape: f32[32,64], index: 2, kind: input, shape index: {}]
  %s3 = inlined_call_operand.hbm [shape: f32[16,64], index: 3, kind: input, shape index: {}]
  %s4 = inlined_call_operand.hbm [shape: f32[1,1,256], index: 4, kind: output, shape index: {}]
  %s5 = sld [smem:[#allocation0]]
  $region42: #{_gibbs_forward_batched.1} parent=0
    _
  %s7 = ssub.s32 1, %s5
  %s8 = scalar_select 0, %s7, %s5
  $region1: #{_gibbs_forward_batched.1} parent=0
    #allocation2 [shape = 'u8[8192]{0}', space=vmem, size = 0x2000, scoped, tag = 'input window, operand 0, single buffered']
    #allocation3 [shape = 's32[1]{0}', space=sflag, size = 0x4, scoped, tag = 'scoped memory for _gibbs_forward_batched.1']
    #allocation4 [shape = 's32[1]{0}', space=sflag, size = 0x4, scoped, tag = 'scoped memory for _gibbs_forward_batched.1']
    #allocation5 [shape = 'u8[20480]{0}', space=vmem, size = 0x5000, scoped, tag = 'input window, operand 1, single buffered']
    #allocation6 [shape = 's32[1]{0}', space=sflag, size = 0x4, scoped, tag = 'scoped memory for _gibbs_forward_batched.1']
    #allocation7 [shape = 'u8[16384]{0}', space=vmem, size = 0x4000, scoped, tag = 'input window, operand 2, single buffered']
    #allocation8 [shape = 'u8[8192]{0}', space=vmem, size = 0x2000, scoped, tag = 'input window, operand 3, single buffered']
    #allocation9 [shape = 's32[1]{0}', space=sflag, size = 0x4, scoped, tag = 'scoped memory for _gibbs_forward_batched.1']
    #allocation10 [shape = 'u8[1024]{0}', space=vmem, size = 0x400, scoped, tag = 'output window, operand 0, single buffered']
    %9 = vsyncpa [#allocation3], 0
    %10 = vsyncpa [#allocation6], 0
    %11 = vsyncpa [#allocation9], 0
    %12 = vsyncpa [#allocation4], 0
    // Predicated region
    $region2: #{_gibbs_forward_batched.1} parent=1 // pred_check
      _
    $region3: #{_gibbs_forward_batched.1} parent=1 // pred_check_branch
      %14 = sbr.rel (0) target = $region5
    $region4: #{_gibbs_forward_batched.1} parent=1 // pred_region
      %s16 = ssub.s32 256, 256
      %17 = vsyncadd [#allocation3], %s16
      %s19 = sshll.u32 [#allocation2], 4
      %s20 = int_to_ptr.vmem [resolvable:$true] %s19
      %22 = dma.hbm_to_vmem [thread:$0]  %s0, 256, %s20, [#allocation3]
    $region5: #{_gibbs_forward_batched.1} parent=1 // pred_fallthru
      _
    // Predicated region
    $region6: #{_gibbs_forward_batched.1} parent=1 // pred_check
      _
    $region7: #{_gibbs_forward_batched.1} parent=1 // pred_check_branch
      %24 = sbr.rel (0) target = $region9
    $region8: #{_gibbs_forward_batched.1} parent=1 // pred_region
      %s26 = ssub.s32 640, 640
      %27 = vsyncadd [#allocation6], %s26
      %s28 = sshll.u32 [#allocation5], 4
      %s29 = int_to_ptr.vmem [resolvable:$true] %s28
      %34 = dma.hbm_to_vmem [thread:$0]  %s1, 640, %s29, [#allocation6], 128, 128, 8
    $region9: #{_gibbs_forward_batched.1} parent=1 // pred_fallthru
      _
    // Predicated region
    $region10: #{_gibbs_forward_batched.1} parent=1 // pred_check
      _
    $region11: #{_gibbs_forward_batched.1} parent=1 // pred_check_branch
      %36 = sbr.rel (0) target = $region13
    $region12: #{_gibbs_forward_batched.1} parent=1 // pred_region
      %s38 = ssub.s32 512, 512
      %39 = vsyncadd [#allocation6], %s38
      %s40 = sshll.u32 [#allocation7], 4
      %s41 = int_to_ptr.vmem [resolvable:$true] %s40
      %46 = dma.hbm_to_vmem [thread:$0]  %s2, 512, %s41, [#allocation6], 128, 128, 8
    $region13: #{_gibbs_forward_batched.1} parent=1 // pred_fallthru
      _
    // Predicated region
    $region14: #{_gibbs_forward_batched.1} parent=1 // pred_check
      _
    $region15: #{_gibbs_forward_batched.1} parent=1 // pred_check_branch
      %48 = sbr.rel (0) target = $region17
    $region16: #{_gibbs_forward_batched.1} parent=1 // pred_region
      %s50 = ssub.s32 256, 256
      %51 = vsyncadd [#allocation9], %s50
      %s52 = sshll.u32 [#allocation8], 4
      %s53 = int_to_ptr.vmem [resolvable:$true] %s52
      %58 = dma.hbm_to_vmem [thread:$0]  %s3, 256, %s53, [#allocation9], 128, 128, 8
    $region17: #{_gibbs_forward_batched.1} parent=1 // pred_fallthru
      _
    // Predicated region
    $region18: #{_gibbs_forward_batched.1} parent=1 // pred_check
      _
    $region19: #{_gibbs_forward_batched.1} parent=1 // pred_check_branch
      %60 = sbr.rel (0) target = $region21
    $region20: #{_gibbs_forward_batched.1} parent=1 // pred_region
      %61 = dma.done [#allocation3], 256
    $region21: #{_gibbs_forward_batched.1} parent=1 // pred_fallthru
      _
    // Predicated region
    $region22: #{_gibbs_forward_batched.1} parent=1 // pred_check
      _
    $region23: #{_gibbs_forward_batched.1} parent=1 // pred_check_branch
      %63 = sbr.rel (0) target = $region25
    $region24: #{_gibbs_forward_batched.1} parent=1 // pred_region
      %64 = dma.done [#allocation6], 640
    $region25: #{_gibbs_forward_batched.1} parent=1 // pred_fallthru
      _
    // Predicated region
    $region26: #{_gibbs_forward_batched.1} parent=1 // pred_check
      _
    $region27: #{_gibbs_forward_batched.1} parent=1 // pred_check_branch
      %66 = sbr.rel (0) target = $region29
    $region28: #{_gibbs_forward_batched.1} parent=1 // pred_region
      %67 = dma.done [#allocation6], 512
    $region29: #{_gibbs_forward_batched.1} parent=1 // pred_fallthru
      _
    // Predicated region
    $region30: #{_gibbs_forward_batched.1} parent=1 // pred_check
      _
    $region31: #{_gibbs_forward_batched.1} parent=1 // pred_check_branch
      %69 = sbr.rel (0) target = $region33
    $region32: #{_gibbs_forward_batched.1} parent=1 // pred_region
      %70 = dma.done [#allocation9], 256
    $region33: #{_gibbs_forward_batched.1} parent=1 // pred_fallthru
      _
    %v71 = vld [vmem:[#allocation2] sm:$0x1f]
    %v72 = vld [vmem:[#allocation2 + $0x8] sm:$0x1f]
    %v73 = vlaneseq
    %v74 = vshrl.u32 %v73, 7
    %v75 = vadd.s32 %v74, 8
    %v76 = vadd.s32 %v74, 16
    %v77 = vadd.s32 %v74, 24
    %v78 = vadd.s32 %v74, 32
    %v79 = vadd.s32 %v74, 40
    %v80 = vadd.s32 %v74, 48
    %v81 = vadd.s32 %v74, 56
    %v82 = vlaneseq
    %v83 = vshrl.u32 %v82, 7
    %v84 = vsub.s32 0, %v83
    %v85 = vrot.slane %v71, %v84
    %v86 = vlaneseq
    %v87 = vshrl.u32 %v86, 7
    %v88 = vsub.s32 0, %v87
    %v89 = vrot.slane %v72, %v88
    %vm90 = vcmp.eq.s32.totalorder %v74, %v85
    %vm91 = vcmp.eq.s32.totalorder %v74, %v89
    %vm92 = vcmp.eq.s32.totalorder %v75, %v85
    %vm93 = vcmp.eq.s32.totalorder %v75, %v89
    %vm94 = vcmp.eq.s32.totalorder %v76, %v85
    %vm95 = vcmp.eq.s32.totalorder %v76, %v89
    %vm96 = vcmp.eq.s32.totalorder %v77, %v85
    %vm97 = vcmp.eq.s32.totalorder %v77, %v89
    %vm98 = vcmp.eq.s32.totalorder %v78, %v85
    %vm99 = vcmp.eq.s32.totalorder %v78, %v89
    %vm100 = vcmp.eq.s32.totalorder %v79, %v85
    %vm101 = vcmp.eq.s32.totalorder %v79, %v89
    %vm102 = vcmp.eq.s32.totalorder %v80, %v85
    %vm103 = vcmp.eq.s32.totalorder %v80, %v89
    %vm104 = vcmp.eq.s32.totalorder %v81, %v85
    %vm105 = vcmp.eq.s32.totalorder %v81, %v89
    %v106 = vsel %vm90, 1, 0
    %v107 = vsel %vm91, 1, 0
    %v108 = vsel %vm92, 1, 0
    %v109 = vsel %vm93, 1, 0
    %v110 = vsel %vm94, 1, 0
    %v111 = vsel %vm95, 1, 0
    %v112 = vsel %vm96, 1, 0
    %v113 = vsel %vm97, 1, 0
    %v114 = vsel %vm98, 1, 0
    %v115 = vsel %vm99, 1, 0
    %v116 = vsel %vm100, 1, 0
    %v117 = vsel %vm101, 1, 0
    %v118 = vsel %vm102, 1, 0
    %v119 = vsel %vm103, 1, 0
    %v120 = vsel %vm104, 1, 0
    %v121 = vsel %vm105, 1, 0
    %v122 = vcvt.s32.f32 %v106
    %v123 = vcvt.s32.f32 %v107
    %v124 = vcvt.s32.f32 %v108
    %v125 = vcvt.s32.f32 %v109
    %v126 = vcvt.s32.f32 %v110
    %v127 = vcvt.s32.f32 %v111
    %v128 = vcvt.s32.f32 %v112
    %v129 = vcvt.s32.f32 %v113
    %v130 = vcvt.s32.f32 %v114
    %v131 = vcvt.s32.f32 %v115
    %v132 = vcvt.s32.f32 %v116
    %v133 = vcvt.s32.f32 %v117
    %v134 = vcvt.s32.f32 %v118
    %v135 = vcvt.s32.f32 %v119
    %v136 = vcvt.s32.f32 %v120
    %v137 = vcvt.s32.f32 %v121
    %v138 = vlaneseq
    %v139 = vshrl.u32 %v138, 7
    %v140 = vsub.s32 1, %v139
    %v141 = vrot.slane %v71, %v140
    %v142 = vlaneseq
    %v143 = vshrl.u32 %v142, 7
    %v144 = vsub.s32 1, %v143
    %v145 = vrot.slane %v72, %v144
    %vm146 = vcmp.eq.s32.totalorder %v74, %v141
    %vm147 = vcmp.eq.s32.totalorder %v74, %v145
    %vm148 = vcmp.eq.s32.totalorder %v75, %v141
    %vm149 = vcmp.eq.s32.totalorder %v75, %v145
    %vm150 = vcmp.eq.s32.totalorder %v76, %v141
    %vm151 = vcmp.eq.s32.totalorder %v76, %v145
    %vm152 = vcmp.eq.s32.totalorder %v77, %v141
    %vm153 = vcmp.eq.s32.totalorder %v77, %v145
    %vm154 = vcmp.eq.s32.totalorder %v78, %v141
    %vm155 = vcmp.eq.s32.totalorder %v78, %v145
    %vm156 = vcmp.eq.s32.totalorder %v79, %v141
    %vm157 = vcmp.eq.s32.totalorder %v79, %v145
    %vm158 = vcmp.eq.s32.totalorder %v80, %v141
    %vm159 = vcmp.eq.s32.totalorder %v80, %v145
    %vm160 = vcmp.eq.s32.totalorder %v81, %v141
    %vm161 = vcmp.eq.s32.totalorder %v81, %v145
    %v162 = vsel %vm146, 1, 0
    %v163 = vsel %vm147, 1, 0
    %v164 = vsel %vm148, 1, 0
    %v165 = vsel %vm149, 1, 0
    %v166 = vsel %vm150, 1, 0
    %v167 = vsel %vm151, 1, 0
    %v168 = vsel %vm152, 1, 0
    %v169 = vsel %vm153, 1, 0
    %v170 = vsel %vm154, 1, 0
    %v171 = vsel %vm155, 1, 0
    %v172 = vsel %vm156, 1, 0
    %v173 = vsel %vm157, 1, 0
    %v174 = vsel %vm158, 1, 0
    %v175 = vsel %vm159, 1, 0
    %v176 = vsel %vm160, 1, 0
    %v177 = vsel %vm161, 1, 0
    %v178 = vcvt.s32.f32 %v162
    %v179 = vcvt.s32.f32 %v163
    %v180 = vcvt.s32.f32 %v164
    %v181 = vcvt.s32.f32 %v165
    %v182 = vcvt.s32.f32 %v166
    %v183 = vcvt.s32.f32 %v167
    %v184 = vcvt.s32.f32 %v168
    %v185 = vcvt.s32.f32 %v169
    %v186 = vcvt.s32.f32 %v170
    %v187 = vcvt.s32.f32 %v171
    %v188 = vcvt.s32.f32 %v172
    %v189 = vcvt.s32.f32 %v173
    %v190 = vcvt.s32.f32 %v174
    %v191 = vcvt.s32.f32 %v175
    %v192 = vcvt.s32.f32 %v176
    %v193 = vcvt.s32.f32 %v177
    %v194 = vld [vmem:[#allocation5] sm:$0xff]
    %v195 = vld [vmem:[#allocation5 + $0x8] sm:$0xff]
    %v196 = vld [vmem:[#allocation5 + $0x10] sm:$0xff]
    %v197 = vld [vmem:[#allocation5 + $0x18] sm:$0xff]
    %v198 = vld [vmem:[#allocation5 + $0x20] sm:$0x1]
    %vm199 = vcmask 523264
    %v201 = vsel %vm199, %v194, 0
    %v204 = vsel %vm199, %v195, 0
    %v207 = vsel %vm199, %v196, 0
    %v210 = vsel %vm199, %v197, 0
    %v213 = vsel %vm199, %v198, 0
    %215 = vmatprep.subr.mxu0 %v123
    %216 = vmatpush1.msra.mxu0 %v122
    %217 = vmatprep.subr.mxu0 %v125
    %218 = vmatpush1.msra.mxu0 %v124
    %219 = vmatprep.subr.mxu0 %v127
    %220 = vmatpush1.msra.mxu0 %v126
    %221 = vmatprep.subr.mxu0 %v129
    %222 = vmatpush1.msra.mxu0 %v128
    %223 = vmatprep.subr.mxu0 %v131
    %224 = vmatpush1.msra.mxu0 %v130
    %225 = vmatprep.subr.mxu0 %v133
    %226 = vmatpush1.msra.mxu0 %v132
    %227 = vmatprep.subr.mxu0 %v135
    %228 = vmatpush1.msra.mxu0 %v134
    %229 = vmatprep.subr.mxu0 %v137
    %230 = vmatpush1.msra.mxu0 %v136
    %231 = vmatprep.subr.mxu0 0.0
    %232 = vmatpush1.msra.mxu0 0.0
    %233 = vmatprep.subr.mxu0 0.0
    %234 = vmatpush1.msra.mxu0 0.0
    %235 = vmatprep.subr.mxu0 0.0
    %236 = vmatpush1.msra.mxu0 0.0
    %237 = vmatprep.subr.mxu0 0.0
    %238 = vmatpush1.msra.mxu0 0.0
    %239 = vmatprep.subr.mxu0 0.0
    %240 = vmatpush1.msra.mxu0 0.0
    %241 = vmatprep.subr.mxu0 0.0
    %242 = vmatpush1.msra.mxu0 0.0
    %243 = vmatprep.subr.mxu0 0.0
    %244 = vmatpush1.msra.mxu0 0.0
    %245 = vmatprep.subr.mxu0 0.0
    %246 = vmatpush1.msra.mxu0 0.0
    %247 = vmatprep.subr.mxu0 0.0
    %248 = vmatpush1.msra.mxu0 0.0
    %249 = vmatprep.subr.mxu0 0.0
    %250 = vmatpush1.msra.mxu0 0.0
    %251 = vmatprep.subr.mxu0 0.0
    %252 = vmatpush1.msra.mxu0 0.0
    %253 = vmatprep.subr.mxu0 0.0
    %254 = vmatpush1.msra.mxu0 0.0
    %255 = vmatprep.subr.mxu0 0.0
    %256 = vmatpush1.msra.mxu0 0.0
    %257 = vmatprep.subr.mxu0 0.0
    %258 = vmatpush1.msra.mxu0 0.0
    %259 = vmatprep.subr.mxu0 0.0
    %260 = vmatpush1.msra.mxu0 0.0
    %261 = vmatprep.subr.mxu0 0.0
    %262 = vmatpush1.msra.mxu0 0.0
    %263 = vmatprep.subr.mxu0 0.0
    %264 = vmatpush1.msra.mxu0 0.0
    %265 = vmatprep.subr.mxu0 0.0
    %266 = vmatpush1.msra.mxu0 0.0
    %267 = vmatprep.subr.mxu0 0.0
    %268 = vmatpush1.msra.mxu0 0.0
    %269 = vmatprep.subr.mxu0 0.0
    %270 = vmatpush1.msra.mxu0 0.0
    %271 = vmatprep.subr.mxu0 0.0
    %272 = vmatpush1.msra.mxu0 0.0
    %273 = vmatprep.subr.mxu0 0.0
    %274 = vmatpush1.msra.mxu0 0.0
    %275 = vmatprep.subr.mxu0 0.0
    %276 = vmatpush1.msra.mxu0 0.0
    %277 = vmatprep.subr.mxu0 0.0
    %278 = vmatpush1.msra.mxu0 0.0
    %279 = vmatprep.mubr.f32.mxu0 0.0
    %280 = vmatmul.mubr.f32.gmra.mrb[0].mxu0 %v201
    %v281 = vpop.f32.mrb[0].mxu0
    %v282 = vadd.f32 0.0, %v281
    %v283 = vpop.f32.mrb[0].mxu0
    %v284 = vadd.f32 0.0, %v283
    %285 = vmatprep.mubr.f32.mxu0 0.0
    %286 = vmatmul.mubr.f32.gmra.mrb[0].mxu0 %v204
    %v287 = vpop.f32.mrb[0].mxu0
    %v288 = vadd.f32 0.0, %v287
    %v289 = vpop.f32.mrb[0].mxu0
    %v290 = vadd.f32 0.0, %v289
    %291 = vmatprep.mubr.f32.mxu0 0.0
    %292 = vmatmul.mubr.f32.gmra.mrb[0].mxu0 %v207
    %v293 = vpop.f32.mrb[0].mxu0
    %v294 = vadd.f32 0.0, %v293
    %v295 = vpop.f32.mrb[0].mxu0
    %v296 = vadd.f32 0.0, %v295
    %297 = vmatprep.mubr.f32.mxu0 0.0
    %298 = vmatmul.mubr.f32.gmra.mrb[0].mxu0 %v210
    %v299 = vpop.f32.mrb[0].mxu0
    %v300 = vadd.f32 0.0, %v299
    %v301 = vpop.f32.mrb[0].mxu0
    %v302 = vadd.f32 0.0, %v301
    %303 = vmatprep.mubr.f32.mxu0 0.0
    %304 = vmatmul.mubr.f32.gmra.mrb[0].mxu0 %v213
    %v305 = vpop.f32.mrb[0].mxu0
    %v306 = vadd.f32 0.0, %v305
    %v307 = vpop.f32.mrb[0].mxu0
    %v308 = vadd.f32 0.0, %v307
    %309 = vdwg.mxu0
    %v310 = vld [vmem:[#allocation7] sm:$0xff]
    %v311 = vld [vmem:[#allocation7 + $0x8] sm:$0xff]
    %v312 = vld [vmem:[#allocation7 + $0x10] sm:$0xff]
    %v313 = vld [vmem:[#allocation7 + $0x18] sm:$0xff]
    %v315 = vsel %vm199, %v310, 0
    %v318 = vsel %vm199, %v311, 0
    %v321 = vsel %vm199, %v312, 0
    %v324 = vsel %vm199, %v313, 0
    %326 = vmatprep.subr.mxu0 %v179
    %327 = vmatpush1.msra.mxu0 %v178
    %328 = vmatprep.subr.mxu0 %v181
    %329 = vmatpush1.msra.mxu0 %v180
    %330 = vmatprep.subr.mxu0 %v183
    %331 = vmatpush1.msra.mxu0 %v182
    %332 = vmatprep.subr.mxu0 %v185
    %333 = vmatpush1.msra.mxu0 %v184
    %334 = vmatprep.subr.mxu0 %v187
    %335 = vmatpush1.msra.mxu0 %v186
    %336 = vmatprep.subr.mxu0 %v189
    %337 = vmatpush1.msra.mxu0 %v188
    %338 = vmatprep.subr.mxu0 %v191
    %339 = vmatpush1.msra.mxu0 %v190
    %340 = vmatprep.subr.mxu0 %v193
    %341 = vmatpush1.msra.mxu0 %v192
    %342 = vmatprep.subr.mxu0 0.0
    %343 = vmatpush1.msra.mxu0 0.0
    %344 = vmatprep.subr.mxu0 0.0
    %345 = vmatpush1.msra.mxu0 0.0
    %346 = vmatprep.subr.mxu0 0.0
    %347 = vmatpush1.msra.mxu0 0.0
    %348 = vmatprep.subr.mxu0 0.0
    %349 = vmatpush1.msra.mxu0 0.0
    %350 = vmatprep.subr.mxu0 0.0
    %351 = vmatpush1.msra.mxu0 0.0
    %352 = vmatprep.subr.mxu0 0.0
    %353 = vmatpush1.msra.mxu0 0.0
    %354 = vmatprep.subr.mxu0 0.0
    %355 = vmatpush1.msra.mxu0 0.0
    %356 = vmatprep.subr.mxu0 0.0
    %357 = vmatpush1.msra.mxu0 0.0
    %358 = vmatprep.subr.mxu0 0.0
    %359 = vmatpush1.msra.mxu0 0.0
    %360 = vmatprep.subr.mxu0 0.0
    %361 = vmatpush1.msra.mxu0 0.0
    %362 = vmatprep.subr.mxu0 0.0
    %363 = vmatpush1.msra.mxu0 0.0
    %364 = vmatprep.subr.mxu0 0.0
    %365 = vmatpush1.msra.mxu0 0.0
    %366 = vmatprep.subr.mxu0 0.0
    %367 = vmatpush1.msra.mxu0 0.0
    %368 = vmatprep.subr.mxu0 0.0
    %369 = vmatpush1.msra.mxu0 0.0
    %370 = vmatprep.subr.mxu0 0.0
    %371 = vmatpush1.msra.mxu0 0.0
    %372 = vmatprep.subr.mxu0 0.0
    %373 = vmatpush1.msra.mxu0 0.0
    %374 = vmatprep.subr.mxu0 0.0
    %375 = vmatpush1.msra.mxu0 0.0
    %376 = vmatprep.subr.mxu0 0.0
    %377 = vmatpush1.msra.mxu0 0.0
    %378 = vmatprep.subr.mxu0 0.0
    %379 = vmatpush1.msra.mxu0 0.0
    %380 = vmatprep.subr.mxu0 0.0
    %381 = vmatpush1.msra.mxu0 0.0
    %382 = vmatprep.subr.mxu0 0.0
    %383 = vmatpush1.msra.mxu0 0.0
    %384 = vmatprep.subr.mxu0 0.0
    %385 = vmatpush1.msra.mxu0 0.0
    %386 = vmatprep.subr.mxu0 0.0
    %387 = vmatpush1.msra.mxu0 0.0
    %388 = vmatprep.subr.mxu0 0.0
    %389 = vmatpush1.msra.mxu0 0.0
    %390 = vmatprep.mubr.f32.mxu0 0.0
    %391 = vmatmul.mubr.f32.gmra.mrb[0].mxu0 %v315
    %v392 = vpop.f32.mrb[0].mxu0
    %v393 = vadd.f32 0.0, %v392
    %v394 = vpop.f32.mrb[0].mxu0
    %v395 = vadd.f32 0.0, %v394
    %396 = vmatprep.mubr.f32.mxu0 0.0
    %397 = vmatmul.mubr.f32.gmra.mrb[0].mxu0 %v318
    %v398 = vpop.f32.mrb[0].mxu0
    %v399 = vadd.f32 0.0, %v398
    %v400 = vpop.f32.mrb[0].mxu0
    %v401 = vadd.f32 0.0, %v400
    %402 = vmatprep.mubr.f32.mxu0 0.0
    %403 = vmatmul.mubr.f32.gmra.mrb[0].mxu0 %v321
    %v404 = vpop.f32.mrb[0].mxu0
    %v405 = vadd.f32 0.0, %v404
    %v406 = vpop.f32.mrb[0].mxu0
    %v407 = vadd.f32 0.0, %v406
    %408 = vmatprep.mubr.f32.mxu0 0.0
    %409 = vmatmul.mubr.f32.gmra.mrb[0].mxu0 %v324
    %v410 = vpop.f32.mrb[0].mxu0
    %v411 = vadd.f32 0.0, %v410
    %v412 = vpop.f32.mrb[0].mxu0
    %v413 = vadd.f32 0.0, %v412
    %414 = vdwg.mxu0
    %v415 = vmul.f32 %v282, %v393
    %v416 = vmul.f32 %v284, %v395
    %v417 = vmul.f32 %v288, %v399
    %v418 = vmul.f32 %v290, %v401
    %v419 = vadd.f32 %v415, %v417
    %v420 = vrot.slane %v419, 4
    %v421 = vadd.f32 %v419, %v420
    %v422 = vrot.slane %v421, 2
    %v423 = vadd.f32 %v421, %v422
    %v424 = vrot.slane %v423, 1
    %v425 = vadd.f32 %v423, %v424
    %v426 = vadd.f32 %v416, %v418
    %v427 = vrot.slane %v426, 4
    %v428 = vadd.f32 %v426, %v427
    %v429 = vrot.slane %v428, 2
    %v430 = vadd.f32 %v428, %v429
    %v431 = vrot.slane %v430, 1
    %v432 = vadd.f32 %v430, %v431
    %v433 = vlaneseq
    %v434 = vshrl.u32 %v433, 7
    %v435 = vsub.s32 2, %v434
    %v436 = vrot.slane %v71, %v435
    %v437 = vlaneseq
    %v438 = vshrl.u32 %v437, 7
    %v439 = vsub.s32 2, %v438
    %v440 = vrot.slane %v72, %v439
    %vm441 = vcmp.eq.s32.totalorder %v74, %v436
    %vm442 = vcmp.eq.s32.totalorder %v74, %v440
    %vm443 = vcmp.eq.s32.totalorder %v75, %v436
    %vm444 = vcmp.eq.s32.totalorder %v75, %v440
    %vm445 = vcmp.eq.s32.totalorder %v76, %v436
    %vm446 = vcmp.eq.s32.totalorder %v76, %v440
    %vm447 = vcmp.eq.s32.totalorder %v77, %v436
    %vm448 = vcmp.eq.s32.totalorder %v77, %v440
    %vm449 = vcmp.eq.s32.totalorder %v78, %v436
    %vm450 = vcmp.eq.s32.totalorder %v78, %v440
    %vm451 = vcmp.eq.s32.totalorder %v79, %v436
    %vm452 = vcmp.eq.s32.totalorder %v79, %v440
    %vm453 = vcmp.eq.s32.totalorder %v80, %v436
    %vm454 = vcmp.eq.s32.totalorder %v80, %v440
    %vm455 = vcmp.eq.s32.totalorder %v81, %v436
    %vm456 = vcmp.eq.s32.totalorder %v81, %v440
    %v457 = vsel %vm441, 1, 0
    %v458 = vsel %vm442, 1, 0
    %v459 = vsel %vm443, 1, 0
    %v460 = vsel %vm444, 1, 0
    %v461 = vsel %vm445, 1, 0
    %v462 = vsel %vm446, 1, 0
    %v463 = vsel %vm447, 1, 0
    %v464 = vsel %vm448, 1, 0
    %v465 = vsel %vm449, 1, 0
    %v466 = vsel %vm450, 1, 0
    %v467 = vsel %vm451, 1, 0
    %v468 = vsel %vm452, 1, 0
    %v469 = vsel %vm453, 1, 0
    %v470 = vsel %vm454, 1, 0
    %v471 = vsel %vm455, 1, 0
    %v472 = vsel %vm456, 1, 0
    %v473 = vlaneseq
    %v474 = vshrl.u32 %v473, 7
    %v475 = vsub.s32 3, %v474
    %v476 = vrot.slane %v71, %v475
    %v477 = vlaneseq
    %v478 = vshrl.u32 %v477, 7
    %v479 = vsub.s32 3, %v478
    %v480 = vrot.slane %v72, %v479
    %vm481 = vcmp.eq.s32.totalorder %v74, %v476
    %vm482 = vcmp.eq.s32.totalorder %v74, %v480
    %vm483 = vcmp.eq.s32.totalorder %v75, %v476
    %vm484 = vcmp.eq.s32.totalorder %v75, %v480
    %vm485 = vcmp.eq.s32.totalorder %v76, %v476
    %vm486 = vcmp.eq.s32.totalorder %v76, %v480
    %vm487 = vcmp.eq.s32.totalorder %v77, %v476
    %vm488 = vcmp.eq.s32.totalorder %v77, %v480
    %vm489 = vcmp.eq.s32.totalorder %v78, %v476
    %vm490 = vcmp.eq.s32.totalorder %v78, %v480
    %vm491 = vcmp.eq.s32.totalorder %v79, %v476
    %vm492 = vcmp.eq.s32.totalorder %v79, %v480
    %vm493 = vcmp.eq.s32.totalorder %v80, %v476
    %vm494 = vcmp.eq.s32.totalorder %v80, %v480
    %vm495 = vcmp.eq.s32.totalorder %v81, %v476
    %vm496 = vcmp.eq.s32.totalorder %v81, %v480
    %v497 = vsel %vm481, 1, 0
    %v498 = vsel %vm482, 1, 0
    %v499 = vsel %vm483, 1, 0
    %v500 = vsel %vm484, 1, 0
    %v501 = vsel %vm485, 1, 0
    %v502 = vsel %vm486, 1, 0
    %v503 = vsel %vm487, 1, 0
    %v504 = vsel %vm488, 1, 0
    %v505 = vsel %vm489, 1, 0
    %v506 = vsel %vm490, 1, 0
    %v507 = vsel %vm491, 1, 0
    %v508 = vsel %vm492, 1, 0
    %v509 = vsel %vm493, 1, 0
    %v510 = vsel %vm494, 1, 0
    %v511 = vsel %vm495, 1, 0
    %v512 = vsel %vm496, 1, 0
    %v513 = vadd.s32 %v457, %v497
    %v514 = vadd.s32 %v458, %v498
    %v515 = vadd.s32 %v459, %v499
    %v516 = vadd.s32 %v460, %v500
    %v517 = vadd.s32 %v461, %v501
    %v518 = vadd.s32 %v462, %v502
    %v519 = vadd.s32 %v463, %v503
    %v520 = vadd.s32 %v464, %v504
    %v521 = vadd.s32 %v465, %v505
    %v522 = vadd.s32 %v466, %v506
    %v523 = vadd.s32 %v467, %v507
    %v524 = vadd.s32 %v468, %v508
    %v525 = vadd.s32 %v469, %v509
    %v526 = vadd.s32 %v470, %v510
    %v527 = vadd.s32 %v471, %v511
    %v528 = vadd.s32 %v472, %v512
    %v529 = vlaneseq
    %v530 = vshrl.u32 %v529, 7
    %v531 = vsub.s32 4, %v530
    %v532 = vrot.slane %v71, %v531
    %v533 = vlaneseq
    %v534 = vshrl.u32 %v533, 7
    %v535 = vsub.s32 4, %v534
    %v536 = vrot.slane %v72, %v535
    %vm537 = vcmp.eq.s32.totalorder %v74, %v532
    %vm538 = vcmp.eq.s32.totalorder %v74, %v536
    %vm539 = vcmp.eq.s32.totalorder %v75, %v532
    %vm540 = vcmp.eq.s32.totalorder %v75, %v536
    %vm541 = vcmp.eq.s32.totalorder %v76, %v532
    %vm542 = vcmp.eq.s32.totalorder %v76, %v536
    %vm543 = vcmp.eq.s32.totalorder %v77, %v532
    %vm544 = vcmp.eq.s32.totalorder %v77, %v536
    %vm545 = vcmp.eq.s32.totalorder %v78, %v532
    %vm546 = vcmp.eq.s32.totalorder %v78, %v536
    %vm547 = vcmp.eq.s32.totalorder %v79, %v532
    %vm548 = vcmp.eq.s32.totalorder %v79, %v536
    %vm549 = vcmp.eq.s32.totalorder %v80, %v532
    %vm550 = vcmp.eq.s32.totalorder %v80, %v536
    %vm551 = vcmp.eq.s32.totalorder %v81, %v532
    %vm552 = vcmp.eq.s32.totalorder %v81, %v536
    %v553 = vsel %vm537, 1, 0
    %v554 = vsel %vm538, 1, 0
    %v555 = vsel %vm539, 1, 0
    %v556 = vsel %vm540, 1, 0
    %v557 = vsel %vm541, 1, 0
    %v558 = vsel %vm542, 1, 0
    %v559 = vsel %vm543, 1, 0
    %v560 = vsel %vm544, 1, 0
    %v561 = vsel %vm545, 1, 0
    %v562 = vsel %vm546, 1, 0
    %v563 = vsel %vm547, 1, 0
    %v564 = vsel %vm548, 1, 0
    %v565 = vsel %vm549, 1, 0
    %v566 = vsel %vm550, 1, 0
    %v567 = vsel %vm551, 1, 0
    %v568 = vsel %vm552, 1, 0
    %v569 = vadd.s32 %v513, %v553
    %v570 = vadd.s32 %v514, %v554
    %v571 = vadd.s32 %v515, %v555
    %v572 = vadd.s32 %v516, %v556
    %v573 = vadd.s32 %v517, %v557
    %v574 = vadd.s32 %v518, %v558
    %v575 = vadd.s32 %v519, %v559
    %v576 = vadd.s32 %v520, %v560
    %v577 = vadd.s32 %v521, %v561
    %v578 = vadd.s32 %v522, %v562
    %v579 = vadd.s32 %v523, %v563
    %v580 = vadd.s32 %v524, %v564
    %v581 = vadd.s32 %v525, %v565
    %v582 = vadd.s32 %v526, %v566
    %v583 = vadd.s32 %v527, %v567
    %v584 = vadd.s32 %v528, %v568
    %v585 = vld [vmem:[#allocation8] sm:$0xff]
    %v586 = vld [vmem:[#allocation8 + $0x8] sm:$0xff]
    %v587 = vcvt.s32.f32 %v569
    %v588 = vcvt.s32.f32 %v570
    %v589 = vcvt.s32.f32 %v571
    %v590 = vcvt.s32.f32 %v572
    %v591 = vcvt.s32.f32 %v573
    %v592 = vcvt.s32.f32 %v574
    %v593 = vcvt.s32.f32 %v575
    %v594 = vcvt.s32.f32 %v576
    %v595 = vcvt.s32.f32 %v577
    %v596 = vcvt.s32.f32 %v578
    %v597 = vcvt.s32.f32 %v579
    %v598 = vcvt.s32.f32 %v580
    %v599 = vcvt.s32.f32 %v581
    %v600 = vcvt.s32.f32 %v582
    %v601 = vcvt.s32.f32 %v583
    %v602 = vcvt.s32.f32 %v584
    %v604 = vsel %vm199, %v585, 0
    %v607 = vsel %vm199, %v586, 0
    %609 = vmatprep.subr.mxu0 %v588
    %610 = vmatpush1.msra.mxu0 %v587
    %611 = vmatprep.subr.mxu0 %v590
    %612 = vmatpush1.msra.mxu0 %v589
    %613 = vmatprep.subr.mxu0 %v592
    %614 = vmatpush1.msra.mxu0 %v591
    %615 = vmatprep.subr.mxu0 %v594
    %616 = vmatpush1.msra.mxu0 %v593
    %617 = vmatprep.subr.mxu0 %v596
    %618 = vmatpush1.msra.mxu0 %v595
    %619 = vmatprep.subr.mxu0 %v598
    %620 = vmatpush1.msra.mxu0 %v597
    %621 = vmatprep.subr.mxu0 %v600
    %622 = vmatpush1.msra.mxu0 %v599
    %623 = vmatprep.subr.mxu0 %v602
    %624 = vmatpush1.msra.mxu0 %v601
    %625 = vmatprep.subr.mxu0 0.0
    %626 = vmatpush1.msra.mxu0 0.0
    %627 = vmatprep.subr.mxu0 0.0
    %628 = vmatpush1.msra.mxu0 0.0
    %629 = vmatprep.subr.mxu0 0.0
    %630 = vmatpush1.msra.mxu0 0.0
    %631 = vmatprep.subr.mxu0 0.0
    %632 = vmatpush1.msra.mxu0 0.0
    %633 = vmatprep.subr.mxu0 0.0
    %634 = vmatpush1.msra.mxu0 0.0
    %635 = vmatprep.subr.mxu0 0.0
    %636 = vmatpush1.msra.mxu0 0.0
    %637 = vmatprep.subr.mxu0 0.0
    %638 = vmatpush1.msra.mxu0 0.0
    %639 = vmatprep.subr.mxu0 0.0
    %640 = vmatpush1.msra.mxu0 0.0
    %641 = vmatprep.subr.mxu0 0.0
    %642 = vmatpush1.msra.mxu0 0.0
    %643 = vmatprep.subr.mxu0 0.0
    %644 = vmatpush1.msra.mxu0 0.0
    %645 = vmatprep.subr.mxu0 0.0
    %646 = vmatpush1.msra.mxu0 0.0
    %647 = vmatprep.subr.mxu0 0.0
    %648 = vmatpush1.msra.mxu0 0.0
    %649 = vmatprep.subr.mxu0 0.0
    %650 = vmatpush1.msra.mxu0 0.0
    %651 = vmatprep.subr.mxu0 0.0
    %652 = vmatpush1.msra.mxu0 0.0
    %653 = vmatprep.subr.mxu0 0.0
    %654 = vmatpush1.msra.mxu0 0.0
    %655 = vmatprep.subr.mxu0 0.0
    %656 = vmatpush1.msra.mxu0 0.0
    %657 = vmatprep.subr.mxu0 0.0
    %658 = vmatpush1.msra.mxu0 0.0
    %659 = vmatprep.subr.mxu0 0.0
    %660 = vmatpush1.msra.mxu0 0.0
    %661 = vmatprep.subr.mxu0 0.0
    %662 = vmatpush1.msra.mxu0 0.0
    %663 = vmatprep.subr.mxu0 0.0
    %664 = vmatpush1.msra.mxu0 0.0
    %665 = vmatprep.subr.mxu0 0.0
    %666 = vmatpush1.msra.mxu0 0.0
    %667 = vmatprep.subr.mxu0 0.0
    %668 = vmatpush1.msra.mxu0 0.0
    %669 = vmatprep.subr.mxu0 0.0
    %670 = vmatpush1.msra.mxu0 0.0
    %671 = vmatprep.subr.mxu0 0.0
    %672 = vmatpush1.msra.mxu0 0.0
    %673 = vmatprep.mubr.f32.mxu0 0.0
    %674 = vmatmul.mubr.f32.gmra.mrb[0].mxu0 %v604
    %v675 = vpop.f32.mrb[0].mxu0
    %v676 = vadd.f32 0.0, %v675
    %v677 = vpop.f32.mrb[0].mxu0
    %v678 = vadd.f32 0.0, %v677
    %679 = vmatprep.mubr.f32.mxu0 0.0
    %680 = vmatmul.mubr.f32.gmra.mrb[0].mxu0 %v607
    %v681 = vpop.f32.mrb[0].mxu0
    %v682 = vadd.f32 0.0, %v681
    %v683 = vpop.f32.mrb[0].mxu0
    %v684 = vadd.f32 0.0, %v683
    %685 = vdwg.mxu0
    %v686 = vmul.f32 %v294, %v405
    %v687 = vmul.f32 %v296, %v407
    %v688 = vmul.f32 %v300, %v411
    %v689 = vmul.f32 %v302, %v413
    %v690 = vmul.f32 %v686, %v676
    %v691 = vmul.f32 %v687, %v678
    %v692 = vmul.f32 %v688, %v682
    %v693 = vmul.f32 %v689, %v684
    %v694 = vadd.f32 %v690, %v692
    %v695 = vrot.slane %v694, 4
    %v696 = vadd.f32 %v694, %v695
    %v697 = vrot.slane %v696, 2
    %v698 = vadd.f32 %v696, %v697
    %v699 = vrot.slane %v698, 1
    %v700 = vadd.f32 %v698, %v699
    %v701 = vadd.f32 %v691, %v693
    %v702 = vrot.slane %v701, 4
    %v703 = vadd.f32 %v701, %v702
    %v704 = vrot.slane %v703, 2
    %v705 = vadd.f32 %v703, %v704
    %v706 = vrot.slane %v705, 1
    %v707 = vadd.f32 %v705, %v706
    %v708 = vadd.f32 %v306, %v425
    %v709 = vadd.f32 %v308, %v432
    %v710 = vadd.f32 %v708, %v700
    %v711 = vadd.f32 %v709, %v707
    %v712 = vxor.u32 %v710, 2147483648
    %v713 = vxor.u32 %v711, 2147483648
    %v714 = vmul.f32 %v712, 1.442695
    %v715 = vpow.pop %v714
    %v716 = vmul.f32 %v713, 1.442695
    %v717 = vpow.pop %v716
    %v718 = vadd.f32 %v715, 1.0
    %v719 = vadd.f32 %v717, 1.0
    %v720 = vrcp.pop %v718
    %v721 = vmul.f32 1.0, %v720
    %v722 = vrcp.pop %v719
    %v723 = vmul.f32 1.0, %v722
    %v726 = vcombine.low %v721, %v723
    %v728 = vunpack.c.l.s4 1966171168
    %v729 = vunpack.c.0.s8 %v728
    %v730 = vlaneseq
    %v731 = vshrl.u32 %v730, 7
    %v732 = vsub.s32 %v729, %v731
    %v733 = vrot.slane %v726, %v732
    %v735 = vunpack.c.l.s4 1966171168
    %v736 = vunpack.c.0.s8 %v735
    %v737 = vlaneseq
    %v738 = vshrl.u32 %v737, 7
    %v739 = vsub.s32 %v736, %v738
    %v740 = vrot.slane %v733, %v739
    %v742 = vlaneseq
    %vm743 = vcmp.ge.s32.totalorder %v742, 0
    %vm744 = vcmp.lt.s32.totalorder %v742, 256
    %vm745 = vmand %vm743, %vm744
    %746 = vst.msk [vmem:[#allocation10] sm:$0x3] %vm745, %v740
    // Predicated region
    $region34: #{_gibbs_forward_batched.1} parent=1 // pred_check
      _
    $region35: #{_gibbs_forward_batched.1} parent=1 // pred_check_branch
      %748 = sbr.rel (0) target = $region37
    $region36: #{_gibbs_forward_batched.1} parent=1 // pred_region
      %s750 = ssub.s32 32, 32
      %751 = vsyncadd [#allocation4], %s750
      %s753 = sshll.u32 [#allocation10], 4
      %s754 = int_to_ptr.vmem [resolvable:$true] %s753
      %756 = dma.vmem_to_hbm [thread:$0]  %s754, 32, %s4, [#allocation4]
    $region37: #{_gibbs_forward_batched.1} parent=1 // pred_fallthru
      _
    // Predicated region
    $region38: #{_gibbs_forward_batched.1} parent=1 // pred_check
      _
    $region39: #{_gibbs_forward_batched.1} parent=1 // pred_check_branch
      %758 = sbr.rel (0) target = $region41
    $region40: #{_gibbs_forward_batched.1} parent=1 // pred_region
      %759 = dma.done [#allocation4], 32
    $region41: #{_gibbs_forward_batched.1} parent=1 // pred_fallthru
      _
    %760 = vsyncpa [#allocation3], 1
    %761 = vsyncpa [#allocation6], 1
    %762 = vsyncpa [#allocation9], 1
    %763 = vsyncpa [#allocation4], 1

</llo_original>
